<compile_context>
chip_gen: v6e
topology: v6e:2x2x1
jax: 0.10.0
libtpu: 0.0.40
codegen_flags: <defaults>
</compile_context>

<pallas_src>
import jax
import jax.numpy as jnp
from jax.experimental import pallas as pl
from jax.experimental.pallas import tpu as pltpu

IN_DIM = 3 * 4 + 4   # 16
H1 = 32
H2 = 32
OUT_DIM = 5

DEFAULT_TILE_B = 4096  # multiple of 128; ~2 MiB of VMEM per step incl. double-buffering


def _round_up(n, m):
    return ((n + m - 1) // m) * m


def snakenet_kernel(x_ref, w1_ref, b1_ref, w2_ref, b2_ref, w3_ref, b3_ref, o_ref):
    # x_ref: (IN_DIM, TILE_B) bf16 — batch on lanes, features on sublanes.
    x = x_ref[...]
    h1 = jnp.dot(w1_ref[...], x, preferred_element_type=jnp.float32) + b1_ref[...]
    h1 = jnp.maximum(h1, 0.0)                                          # ReLU (f32, VPU)
    h2 = jnp.dot(w2_ref[...], h1.astype(w2_ref.dtype),
                 preferred_element_type=jnp.float32) + b2_ref[...]
    h2 = jnp.maximum(h2, 0.0)                                          # ReLU
    logits = jnp.dot(w3_ref[...], h2.astype(w3_ref.dtype),
                     preferred_element_type=jnp.float32) + b3_ref[...]  # (5, TILE_B) f32

    # Numerically stable softmax over the 5 classes (sublane axis), unrolled so the
    # max/sum are pairwise VPU ops instead of an axis reduction over a padded vreg.
    rows = [logits[i:i + 1, :] for i in range(OUT_DIM)]
    m = rows[0]
    for r in rows[1:]:
        m = jnp.maximum(m, r)
    e = jnp.exp(logits - m)                                            # EUP
    s = e[0:1, :]
    for i in range(1, OUT_DIM):
        s = s + e[i:i + 1, :]
    o_ref[...] = (e * pl.reciprocal(s, approx=True)).astype(o_ref.dtype)


def snakenet_forward(x, params, tile_b=DEFAULT_TILE_B):
    """x: (B, IN_DIM) float32.  Returns (B, OUT_DIM) float32 softmax probabilities."""
    w1, b1, w2, b2, w3, b3 = params
    B = x.shape[0]

    # Tile the batch (lane axis); pad B up to a multiple of the tile.
    tile_b = min(tile_b, _round_up(B, 128))
    b_pad = _round_up(B, tile_b)
    grid = (b_pad // tile_b,)

    # Transposed layout + bf16 matmul operands (layout change done in the wrapper,
    # not with an in-kernel transpose).  Padded columns are zero; they produce
    # finite softmax values and are sliced away below.
    x_t = jnp.pad(x.T.astype(jnp.bfloat16), ((0, 0), (0, b_pad - B)))
    w1b = w1.astype(jnp.bfloat16)
    w2b = w2.astype(jnp.bfloat16)
    w3b = w3.astype(jnp.bfloat16)

    flops = 2 * b_pad * (IN_DIM * H1 + H1 * H2 + H2 * OUT_DIM)
    bytes_accessed = (b_pad * (IN_DIM * 2 + OUT_DIM * 4)          # x (bf16) + out (f32)
                      + 2 * (H1 * IN_DIM + H2 * H1 + OUT_DIM * H2)  # weights (bf16)
                      + 4 * (H1 + H2 + OUT_DIM))                    # biases (f32)
    cost = pl.CostEstimate(flops=flops, transcendentals=OUT_DIM * b_pad,
                           bytes_accessed=bytes_accessed)

    out_t = pl.pallas_call(
        snakenet_kernel,
        out_shape=jax.ShapeDtypeStruct((OUT_DIM, b_pad), jnp.float32),
        grid=grid,
        in_specs=[
            pl.BlockSpec((IN_DIM, tile_b), lambda i: (0, i)),     # x tile (pipelined)
            pl.BlockSpec((H1, IN_DIM), lambda i: (0, 0)),         # weights/biases resident
            pl.BlockSpec((H1, 1), lambda i: (0, 0)),
            pl.BlockSpec((H2, H1), lambda i: (0, 0)),
            pl.BlockSpec((H2, 1), lambda i: (0, 0)),
            pl.BlockSpec((OUT_DIM, H2), lambda i: (0, 0)),
            pl.BlockSpec((OUT_DIM, 1), lambda i: (0, 0)),
        ],
        out_specs=pl.BlockSpec((OUT_DIM, tile_b), lambda i: (0, i)),
        compiler_params=pltpu.CompilerParams(
            dimension_semantics=("parallel",)),                   # megacore on v7x
        cost_estimate=cost,
    )(x_t, w1b, b1, w2b, b2, w3b, b3)

    return out_t.T[:B]                                            # (B, OUT_DIM)


def init_params(key):
    """Deterministic init mimicking torch.nn.Linear (uniform +/- 1/sqrt(fan_in)).
    Weights stored (out, in) like torch; biases as (out, 1) for 2-D TPU layout."""
    dims = [IN_DIM, H1, H2, OUT_DIM]
    params = []
    for i in range(len(dims) - 1):
        fan_in, fan_out = dims[i], dims[i + 1]
        key, kw, kb = jax.random.split(key, 3)
        bound = 1.0 / (fan_in ** 0.5)
        w = jax.random.uniform(kw, (fan_out, fan_in), jnp.float32, -bound, bound)
        b = jax.random.uniform(kb, (fan_out, 1), jnp.float32, -bound, bound)
        params.extend([w, b])
    return tuple(params)


def reference_forward(x, params):
    """Pure-JAX f32 reference (matches the PyTorch module: Linear/ReLU x2, Linear, Softmax(dim=1))."""
    w1, b1, w2, b2, w3, b3 = params
    h1 = jnp.maximum(x @ w1.T + b1.T, 0.0)
    h2 = jnp.maximum(h1 @ w2.T + b2.T, 0.0)
    return jax.nn.softmax(h2 @ w3.T + b3.T, axis=-1)


if __name__ == "__main__":
    key = jax.random.PRNGKey(0)
    key, kx = jax.random.split(key)
    B = 8
    x = jax.random.normal(kx, (B, IN_DIM), jnp.float32)
    params = init_params(key)

    out = snakenet_forward(x, params)
    out = jax.block_until_ready(out)

    ref = reference_forward(x, params)
    assert out.shape == (B, OUT_DIM)
    # bf16 matmul operands + approx reciprocal => relaxed tolerance vs f32 reference.
    assert jnp.allclose(out, ref, atol=2e-2, rtol=2e-2)
    assert jnp.allclose(jnp.sum(out, axis=-1), 1.0, atol=5e-3)

    print("KERNEL_OK")
</pallas_src>

<mosaic_0001>
module attributes {stable_mosaic.version = 11 : i64} {
  func.func @snakenet_kernel(%arg0: i32, %arg1: memref<16x128xbf16, #tpu.memory_space<vmem>>, %arg2: memref<32x16xbf16, #tpu.memory_space<vmem>>, %arg3: memref<32x1xf32, #tpu.memory_space<vmem>>, %arg4: memref<32x32xbf16, #tpu.memory_space<vmem>>, %arg5: memref<32x1xf32, #tpu.memory_space<vmem>>, %arg6: memref<5x32xbf16, #tpu.memory_space<vmem>>, %arg7: memref<5x1xf32, #tpu.memory_space<vmem>>, %arg8: memref<5x128xf32, #tpu.memory_space<vmem>>) attributes {dimension_semantics = [#tpu.dimension_semantics<parallel>], iteration_bounds = array<i64: 1>, scalar_prefetch = 0 : i64, scratch_operands = 0 : i64, tpu.core_type = #tpu.core_type<tc>, window_params = [{transform_indices = @transform_0, window_bounds = array<i64: 16, 128>}, {pipeline_mode = #tpu.pipeline_mode<synchronous>, transform_indices = @transform_1, window_bounds = array<i64: 32, 16>}, {pipeline_mode = #tpu.pipeline_mode<synchronous>, transform_indices = @transform_2, window_bounds = array<i64: 32, 1>}, {pipeline_mode = #tpu.pipeline_mode<synchronous>, transform_indices = @transform_3, window_bounds = array<i64: 32, 32>}, {pipeline_mode = #tpu.pipeline_mode<synchronous>, transform_indices = @transform_4, window_bounds = array<i64: 32, 1>}, {pipeline_mode = #tpu.pipeline_mode<synchronous>, transform_indices = @transform_5, window_bounds = array<i64: 5, 32>}, {pipeline_mode = #tpu.pipeline_mode<synchronous>, transform_indices = @transform_6, window_bounds = array<i64: 5, 1>}, {transform_indices = @transform_7, window_bounds = array<i64: 5, 128>}]} {
    %c0 = arith.constant 0 : index
    %c0_0 = arith.constant 0 : index
    %0 = vector.load %arg1[%c0, %c0_0] : memref<16x128xbf16, #tpu.memory_space<vmem>>, vector<16x128xbf16>
    %c0_1 = arith.constant 0 : index
    %c0_2 = arith.constant 0 : index
    %1 = vector.load %arg2[%c0_1, %c0_2] : memref<32x16xbf16, #tpu.memory_space<vmem>>, vector<32x16xbf16>
    %cst = arith.constant dense<0.000000e+00> : vector<32x128xf32>
    %2 = tpu.matmul %1, %0, %cst {dimension_numbers = #tpu.dot_dimension_numbers<[1], [0], [0], [1], [0, 0, 1, 1], [], []>} : vector<32x16xbf16>, vector<16x128xbf16>, vector<32x128xf32> -> vector<32x128xf32>
    %c0_3 = arith.constant 0 : index
    %c0_4 = arith.constant 0 : index
    %3 = vector.load %arg3[%c0_3, %c0_4] : memref<32x1xf32, #tpu.memory_space<vmem>>, vector<32x1xf32>
    %4 = vector.broadcast %3 : vector<32x1xf32> to vector<32x128xf32>
    %5 = arith.addf %2, %4 : vector<32x128xf32>
    %cst_5 = arith.constant 0.000000e+00 : f32
    %6 = vector.broadcast %cst_5 : f32 to vector<32x128xf32>
    %7 = arith.maximumf %5, %6 : vector<32x128xf32>
    %c0_6 = arith.constant 0 : index
    %c0_7 = arith.constant 0 : index
    %8 = vector.load %arg4[%c0_6, %c0_7] : memref<32x32xbf16, #tpu.memory_space<vmem>>, vector<32x32xbf16>
    %9 = arith.truncf %7 : vector<32x128xf32> to vector<32x128xbf16>
    %cst_8 = arith.constant dense<0.000000e+00> : vector<32x128xf32>
    %10 = tpu.matmul %8, %9, %cst_8 {dimension_numbers = #tpu.dot_dimension_numbers<[1], [0], [0], [1], [0, 0, 1, 1], [], []>} : vector<32x32xbf16>, vector<32x128xbf16>, vector<32x128xf32> -> vector<32x128xf32>
    %c0_9 = arith.constant 0 : index
    %c0_10 = arith.constant 0 : index
    %11 = vector.load %arg5[%c0_9, %c0_10] : memref<32x1xf32, #tpu.memory_space<vmem>>, vector<32x1xf32>
    %12 = vector.broadcast %11 : vector<32x1xf32> to vector<32x128xf32>
    %13 = arith.addf %10, %12 : vector<32x128xf32>
    %cst_11 = arith.constant 0.000000e+00 : f32
    %14 = vector.broadcast %cst_11 : f32 to vector<32x128xf32>
    %15 = arith.maximumf %13, %14 : vector<32x128xf32>
    %c0_12 = arith.constant 0 : index
    %c0_13 = arith.constant 0 : index
    %16 = vector.load %arg6[%c0_12, %c0_13] : memref<5x32xbf16, #tpu.memory_space<vmem>>, vector<5x32xbf16>
    %17 = arith.truncf %15 : vector<32x128xf32> to vector<32x128xbf16>
    %cst_14 = arith.constant dense<0.000000e+00> : vector<5x128xf32>
    %18 = tpu.matmul %16, %17, %cst_14 {dimension_numbers = #tpu.dot_dimension_numbers<[1], [0], [0], [1], [0, 0, 1, 1], [], []>} : vector<5x32xbf16>, vector<32x128xbf16>, vector<5x128xf32> -> vector<5x128xf32>
    %c0_15 = arith.constant 0 : index
    %c0_16 = arith.constant 0 : index
    %19 = vector.load %arg7[%c0_15, %c0_16] : memref<5x1xf32, #tpu.memory_space<vmem>>, vector<5x1xf32>
    %20 = vector.broadcast %19 : vector<5x1xf32> to vector<5x128xf32>
    %21 = arith.addf %18, %20 : vector<5x128xf32>
    %22 = vector.extract_strided_slice %21 {offsets = [0, 0], sizes = [1, 128], strides = [1, 1]} : vector<5x128xf32> to vector<1x128xf32>
    %23 = vector.extract_strided_slice %21 {offsets = [1, 0], sizes = [1, 128], strides = [1, 1]} : vector<5x128xf32> to vector<1x128xf32>
    %24 = vector.extract_strided_slice %21 {offsets = [2, 0], sizes = [1, 128], strides = [1, 1]} : vector<5x128xf32> to vector<1x128xf32>
    %25 = vector.extract_strided_slice %21 {offsets = [3, 0], sizes = [1, 128], strides = [1, 1]} : vector<5x128xf32> to vector<1x128xf32>
    %26 = vector.extract_strided_slice %21 {offsets = [4, 0], sizes = [1, 128], strides = [1, 1]} : vector<5x128xf32> to vector<1x128xf32>
    %27 = arith.maximumf %22, %23 : vector<1x128xf32>
    %28 = arith.maximumf %27, %24 : vector<1x128xf32>
    %29 = arith.maximumf %28, %25 : vector<1x128xf32>
    %30 = arith.maximumf %29, %26 : vector<1x128xf32>
    %31 = vector.broadcast %30 : vector<1x128xf32> to vector<5x128xf32>
    %32 = arith.subf %21, %31 : vector<5x128xf32>
    %33 = math.exp %32 : vector<5x128xf32>
    %34 = vector.extract_strided_slice %33 {offsets = [0, 0], sizes = [1, 128], strides = [1, 1]} : vector<5x128xf32> to vector<1x128xf32>
    %35 = vector.extract_strided_slice %33 {offsets = [1, 0], sizes = [1, 128], strides = [1, 1]} : vector<5x128xf32> to vector<1x128xf32>
    %36 = arith.addf %34, %35 : vector<1x128xf32>
    %37 = vector.extract_strided_slice %33 {offsets = [2, 0], sizes = [1, 128], strides = [1, 1]} : vector<5x128xf32> to vector<1x128xf32>
    %38 = arith.addf %36, %37 : vector<1x128xf32>
    %39 = vector.extract_strided_slice %33 {offsets = [3, 0], sizes = [1, 128], strides = [1, 1]} : vector<5x128xf32> to vector<1x128xf32>
    %40 = arith.addf %38, %39 : vector<1x128xf32>
    %41 = vector.extract_strided_slice %33 {offsets = [4, 0], sizes = [1, 128], strides = [1, 1]} : vector<5x128xf32> to vector<1x128xf32>
    %42 = arith.addf %40, %41 : vector<1x128xf32>
    %43 = tpu.reciprocal %42 {approx = true} : vector<1x128xf32> -> vector<1x128xf32>
    %44 = vector.broadcast %43 : vector<1x128xf32> to vector<5x128xf32>
    %45 = arith.mulf %33, %44 : vector<5x128xf32>
    %c0_17 = arith.constant 0 : index
    %c0_18 = arith.constant 0 : index
    %46 = vector.load %arg8[%c0_17, %c0_18] : memref<5x128xf32, #tpu.memory_space<vmem>>, vector<5x128xf32>
    tpu.vector_store %arg8[%c0_17, %c0_18], %45 {strides = array<i32>} : memref<5x128xf32, #tpu.memory_space<vmem>>, vector<5x128xf32>,
    return
  }
  func.func @transform_0(%arg0: i32) -> (i32, i32) {
    %c0_i32 = arith.constant 0 : i32
    %c0_i32_0 = arith.constant 0 : i32
    return %c0_i32, %arg0 : i32, i32
  }
  func.func @transform_1(%arg0: i32) -> (i32, i32) {
    %c0_i32 = arith.constant 0 : i32
    %c0_i32_0 = arith.constant 0 : i32
    %c0_i32_1 = arith.constant 0 : i32
    return %c0_i32, %c0_i32_0 : i32, i32
  }
  func.func @transform_2(%arg0: i32) -> (i32, i32) {
    %c0_i32 = arith.constant 0 : i32
    %c0_i32_0 = arith.constant 0 : i32
    %c0_i32_1 = arith.constant 0 : i32
    return %c0_i32, %c0_i32_0 : i32, i32
  }
  func.func @transform_3(%arg0: i32) -> (i32, i32) {
    %c0_i32 = arith.constant 0 : i32
    %c0_i32_0 = arith.constant 0 : i32
    %c0_i32_1 = arith.constant 0 : i32
    return %c0_i32, %c0_i32_0 : i32, i32
  }
  func.func @transform_4(%arg0: i32) -> (i32, i32) {
    %c0_i32 = arith.constant 0 : i32
    %c0_i32_0 = arith.constant 0 : i32
    %c0_i32_1 = arith.constant 0 : i32
    return %c0_i32, %c0_i32_0 : i32, i32
  }
  func.func @transform_5(%arg0: i32) -> (i32, i32) {
    %c0_i32 = arith.constant 0 : i32
    %c0_i32_0 = arith.constant 0 : i32
    %c0_i32_1 = arith.constant 0 : i32
    return %c0_i32, %c0_i32_0 : i32, i32
  }
  func.func @transform_6(%arg0: i32) -> (i32, i32) {
    %c0_i32 = arith.constant 0 : i32
    %c0_i32_0 = arith.constant 0 : i32
    %c0_i32_1 = arith.constant 0 : i32
    return %c0_i32, %c0_i32_0 : i32, i32
  }
  func.func @transform_7(%arg0: i32) -> (i32, i32) {
    %c0_i32 = arith.constant 0 : i32
    %c0_i32_0 = arith.constant 0 : i32
    return %c0_i32, %arg0 : i32, i32
  }
}

</mosaic_0001>

<llo_original>
// kernel: tpu_custom_call.1
$region0: #{tpu_custom_call.1}
  #allocation0 [shape = 'u32[]', space=smem, size = 0x4, offset = 0x4, fixed_abs, tag = 'smem constant byte address 0x4 - core index']
  #allocation1 [shape = 'u32[144,128]{1,0:T(1,128)}', space=vmem, size = 0x12000, scoped, tag = 'internal scratch']
  %s0 = inlined_call_operand.vmem [shape: bf16[16,128], index: 0, kind: input, shape index: {}]
  %s1 = inlined_call_operand.vmem [shape: bf16[32,16], index: 1, kind: input, shape index: {}]
  %s2 = inlined_call_operand.vmem [shape: f32[32,1], index: 2, kind: input, shape index: {}]
  %s3 = inlined_call_operand.vmem [shape: bf16[32,32], index: 3, kind: input, shape index: {}]
  %s4 = inlined_call_operand.vmem [shape: f32[32,1], index: 4, kind: input, shape index: {}]
  %s5 = inlined_call_operand.vmem [shape: bf16[5,32], index: 5, kind: input, shape index: {}]
  %s6 = inlined_call_operand.vmem [shape: f32[5,1], index: 6, kind: input, shape index: {}]
  %s7 = inlined_call_operand.hbm [shape: f32[5,128], index: 7, kind: output, shape index: {}]
  %s8 = sld [smem:[#allocation0]]
  $region38: #{tpu_custom_call.1} parent=0
    _
  %s10 = ssub.s32 1, %s8
  %s11 = scalar_select 0, %s10, %s8
  $region1: #{tpu_custom_call.1} parent=0
    #allocation2 [shape = 'u8[4096]{0}', space=vmem, size = 0x1000, scoped, tag = 'output window, operand 0, single buffered']
    #allocation3 [shape = 's32[1]{0}', space=sflag, size = 0x4, scoped, tag = 'scoped memory for tpu_custom_call.1']
    %12 = vsyncpa [#allocation3], 0
    // Predicated region
    $region2: #{tpu_custom_call.1} parent=1 // pred_check
      _
    $region3: #{tpu_custom_call.1} parent=1 // pred_check_branch
      %14 = sbr.rel (0) target = $region5
    $region4: #{tpu_custom_call.1} parent=1 // pred_region
      _
    $region5: #{tpu_custom_call.1} parent=1 // pred_fallthru
      _
    // Predicated region
    $region6: #{tpu_custom_call.1} parent=1 // pred_check
      _
    $region7: #{tpu_custom_call.1} parent=1 // pred_check_branch
      %16 = sbr.rel (0) target = $region9
    $region8: #{tpu_custom_call.1} parent=1 // pred_region
      _
    $region9: #{tpu_custom_call.1} parent=1 // pred_fallthru
      _
    // Predicated region
    $region10: #{tpu_custom_call.1} parent=1 // pred_check
      _
    $region11: #{tpu_custom_call.1} parent=1 // pred_check_branch
      %18 = sbr.rel (0) target = $region13
    $region12: #{tpu_custom_call.1} parent=1 // pred_region
      _
    $region13: #{tpu_custom_call.1} parent=1 // pred_fallthru
      _
    // Predicated region
    $region14: #{tpu_custom_call.1} parent=1 // pred_check
      _
    $region15: #{tpu_custom_call.1} parent=1 // pred_check_branch
      %20 = sbr.rel (0) target = $region17
    $region16: #{tpu_custom_call.1} parent=1 // pred_region
      _
    $region17: #{tpu_custom_call.1} parent=1 // pred_fallthru
      _
    // Predicated region
    $region18: #{tpu_custom_call.1} parent=1 // pred_check
      _
    $region19: #{tpu_custom_call.1} parent=1 // pred_check_branch
      %22 = sbr.rel (0) target = $region21
    $region20: #{tpu_custom_call.1} parent=1 // pred_region
      _
    $region21: #{tpu_custom_call.1} parent=1 // pred_fallthru
      _
    // Predicated region
    $region22: #{tpu_custom_call.1} parent=1 // pred_check
      _
    $region23: #{tpu_custom_call.1} parent=1 // pred_check_branch
      %24 = sbr.rel (0) target = $region25
    $region24: #{tpu_custom_call.1} parent=1 // pred_region
      _
    $region25: #{tpu_custom_call.1} parent=1 // pred_fallthru
      _
    // Predicated region
    $region26: #{tpu_custom_call.1} parent=1 // pred_check
      _
    $region27: #{tpu_custom_call.1} parent=1 // pred_check_branch
      %26 = sbr.rel (0) target = $region29
    $region28: #{tpu_custom_call.1} parent=1 // pred_region
      _
    $region29: #{tpu_custom_call.1} parent=1 // pred_fallthru
      _
    %v28 = vld [vmem:[%s0] sm:$0xf]
    %v29 = vld [vmem:[%s0 + $0x4] sm:$0xf]
    %v30 = vld [vmem:[%s1] sm:$0xf]
    %v31 = vld [vmem:[%s1 + $0x4] sm:$0xf]
    %v32 = vld [vmem:[%s1 + $0x8] sm:$0xf]
    %v33 = vld [vmem:[%s1 + $0xc] sm:$0xf]
    %v34 = vld [vmem:[%s2] sm:$0xff]
    %v35 = vld [vmem:[%s2 + $0x8] sm:$0xff]
    %v36 = vld [vmem:[%s2 + $0x10] sm:$0xff]
    %v37 = vld [vmem:[%s2 + $0x18] sm:$0xff]
    %39 = vset.pattern.permute.xlu0 0
    %40 = vperm.xlu0 %39, %v34
    %v41 = vpop.permute.xlu0 %40
    %44 = vset.pattern.permute.xlu0 0
    %45 = vperm.xlu0 %44, %v35
    %v46 = vpop.permute.xlu0 %45
    %49 = vset.pattern.permute.xlu0 0
    %50 = vperm.xlu0 %49, %v36
    %v51 = vpop.permute.xlu0 %50
    %54 = vset.pattern.permute.xlu0 0
    %55 = vperm.xlu0 %54, %v37
    %v56 = vpop.permute.xlu0 %55
    %v62 = vunpack.c.l.b16 %v30
    %v63 = vunpack.c.l.b16 %v31
    %v64 = vunpack.c.l.b16 %v32
    %v65 = vunpack.c.l.b16 %v33
    %v66 = vpack.c.b16 %v63, %v62
    %v67 = vpack.c.b16 %v65, %v64
    %v70 = vunpack.c.l.b16 %v28
    %v71 = vunpack.c.l.b16 %v29
    %v72 = vpack.c.b16 %v71, %v70
    %vm74 = vcmask 130048
    %v76 = vsel %vm74, %v66, 0
    %v79 = vsel %vm74, %v67, 0
    %81 = vmatprep.subr.bf16.mxu0 0
    %82 = vmatpush1.bf16.msra.mxu0 0
    %83 = vmatprep.subr.bf16.mxu0 0
    %84 = vmatpush1.bf16.msra.mxu0 0
    %85 = vmatprep.subr.bf16.mxu0 0
    %86 = vmatpush1.bf16.msra.mxu0 0
    %87 = vmatprep.subr.bf16.mxu0 0
    %88 = vmatpush1.bf16.msra.mxu0 0
    %89 = vmatprep.subr.bf16.mxu0 0
    %90 = vmatpush1.bf16.msra.mxu0 0
    %91 = vmatprep.subr.bf16.mxu0 0
    %92 = vmatpush1.bf16.msra.mxu0 0
    %93 = vmatprep.subr.bf16.mxu0 0
    %94 = vmatpush1.bf16.msra.mxu0 0
    %95 = vmatprep.subr.bf16.mxu0 0
    %96 = vmatpush1.bf16.msra.mxu0 %v72
    %97 = vmatprep.subr.bf16.mxu0 0
    %98 = vmatpush2.bf16.msra.mxu0 0
    %99 = vmatprep.subr.bf16.mxu0 0
    %100 = vmatpush2.bf16.msra.mxu0 0
    %101 = vmatprep.subr.bf16.mxu0 0
    %102 = vmatpush2.bf16.msra.mxu0 0
    %103 = vmatprep.subr.bf16.mxu0 0
    %104 = vmatpush2.bf16.msra.mxu0 0
    %105 = vmatprep.subr.bf16.mxu0 0
    %106 = vmatpush2.bf16.msra.mxu0 0
    %107 = vmatprep.subr.bf16.mxu0 0
    %108 = vmatpush2.bf16.msra.mxu0 0
    %109 = vmatprep.subr.bf16.mxu0 0
    %110 = vmatpush2.bf16.msra.mxu0 0
    %111 = vmatprep.subr.bf16.mxu0 0
    %112 = vmatpush2.bf16.msra.mxu0 0
    %113 = vmatprep.mubr.bf16.mxu0 0
    %114 = vmatmul.mubr.bf16.gmra.mxu0 %v76
    %v115 = vpop.f32.mrf.mxu0
    %v116 = vadd.f32 %v41, %v115
    %v117 = vpop.f32.mrf.mxu0
    %v118 = vpop.f32.mrf.mxu0
    %v119 = vadd.f32 %v46, %v118
    %v120 = vpop.f32.mrf.mxu0
    %121 = vmatprep.mubr.bf16.mxu0 0
    %122 = vmatmul.mubr.bf16.gmra.mxu0 %v79
    %v123 = vpop.f32.mrf.mxu0
    %v124 = vadd.f32 %v51, %v123
    %v125 = vpop.f32.mrf.mxu0
    %v126 = vpop.f32.mrf.mxu0
    %v127 = vadd.f32 %v56, %v126
    %v128 = vpop.f32.mrf.mxu0
    %129 = vdwg.mxu0
    %v130 = vmax.f32 %v116, 0.0
    %v131 = vmax.f32 %v119, 0.0
    %v132 = vmax.f32 %v124, 0.0
    %v133 = vmax.f32 %v127, 0.0
    %v134 = vld [vmem:[%s3] sm:$0xf]
    %v135 = vld [vmem:[%s3 + $0x4] sm:$0xf]
    %v136 = vld [vmem:[%s3 + $0x8] sm:$0xf]
    %v137 = vld [vmem:[%s3 + $0xc] sm:$0xf]
    %v138 = vpack.c.bf16 %v131, %v130
    %v139 = vpack.c.bf16 %v133, %v132
    %v140 = vld [vmem:[%s4] sm:$0xff]
    %v141 = vld [vmem:[%s4 + $0x8] sm:$0xff]
    %v142 = vld [vmem:[%s4 + $0x10] sm:$0xff]
    %v143 = vld [vmem:[%s4 + $0x18] sm:$0xff]
    %145 = vset.pattern.permute.xlu0 0
    %146 = vperm.xlu0 %145, %v140
    %v147 = vpop.permute.xlu0 %146
    %150 = vset.pattern.permute.xlu0 0
    %151 = vperm.xlu0 %150, %v141
    %v152 = vpop.permute.xlu0 %151
    %155 = vset.pattern.permute.xlu0 0
    %156 = vperm.xlu0 %155, %v142
    %v157 = vpop.permute.xlu0 %156
    %160 = vset.pattern.permute.xlu0 0
    %161 = vperm.xlu0 %160, %v143
    %v162 = vpop.permute.xlu0 %161
    %v168 = vunpack.c.l.b16 %v134
    %v169 = vunpack.c.l.b16 %v135
    %v170 = vunpack.c.l.b16 %v136
    %v171 = vunpack.c.l.b16 %v137
    %v172 = vpack.c.b16 %v169, %v168
    %v173 = vpack.c.b16 %v171, %v170
    %vm174 = vcmask 261120
    %v176 = vsel %vm174, %v172, 0
    %v179 = vsel %vm174, %v173, 0
    %181 = vmatprep.subr.bf16.mxu0 0
    %182 = vmatpush1.bf16.msra.mxu0 0
    %183 = vmatprep.subr.bf16.mxu0 0
    %184 = vmatpush1.bf16.msra.mxu0 0
    %185 = vmatprep.subr.bf16.mxu0 0
    %186 = vmatpush1.bf16.msra.mxu0 0
    %187 = vmatprep.subr.bf16.mxu0 0
    %188 = vmatpush1.bf16.msra.mxu0 0
    %189 = vmatprep.subr.bf16.mxu0 0
    %190 = vmatpush1.bf16.msra.mxu0 0
    %191 = vmatprep.subr.bf16.mxu0 0
    %192 = vmatpush1.bf16.msra.mxu0 0
    %193 = vmatprep.subr.bf16.mxu0 0
    %194 = vmatpush1.bf16.msra.mxu0 %v139
    %195 = vmatprep.subr.bf16.mxu0 0
    %196 = vmatpush1.bf16.msra.mxu0 %v138
    %197 = vmatprep.subr.bf16.mxu0 0
    %198 = vmatpush2.bf16.msra.mxu0 0
    %199 = vmatprep.subr.bf16.mxu0 0
    %200 = vmatpush2.bf16.msra.mxu0 0
    %201 = vmatprep.subr.bf16.mxu0 0
    %202 = vmatpush2.bf16.msra.mxu0 0
    %203 = vmatprep.subr.bf16.mxu0 0
    %204 = vmatpush2.bf16.msra.mxu0 0
    %205 = vmatprep.subr.bf16.mxu0 0
    %206 = vmatpush2.bf16.msra.mxu0 0
    %207 = vmatprep.subr.bf16.mxu0 0
    %208 = vmatpush2.bf16.msra.mxu0 0
    %209 = vmatprep.subr.bf16.mxu0 0
    %210 = vmatpush2.bf16.msra.mxu0 0
    %211 = vmatprep.subr.bf16.mxu0 0
    %212 = vmatpush2.bf16.msra.mxu0 0
    %213 = vmatprep.mubr.bf16.mxu0 0
    %214 = vmatmul.mubr.bf16.gmra.mxu0 %v176
    %v215 = vpop.f32.mrf.mxu0
    %v216 = vadd.f32 %v147, %v215
    %v217 = vpop.f32.mrf.mxu0
    %v218 = vpop.f32.mrf.mxu0
    %v219 = vadd.f32 %v152, %v218
    %v220 = vpop.f32.mrf.mxu0
    %221 = vmatprep.mubr.bf16.mxu0 0
    %222 = vmatmul.mubr.bf16.gmra.mxu0 %v179
    %v223 = vpop.f32.mrf.mxu0
    %v224 = vadd.f32 %v157, %v223
    %v225 = vpop.f32.mrf.mxu0
    %v226 = vpop.f32.mrf.mxu0
    %v227 = vadd.f32 %v162, %v226
    %v228 = vpop.f32.mrf.mxu0
    %229 = vdwg.mxu0
    %v230 = vmax.f32 %v216, 0.0
    %v231 = vmax.f32 %v219, 0.0
    %v232 = vmax.f32 %v224, 0.0
    %v233 = vmax.f32 %v227, 0.0
    %v234 = vld [vmem:[%s5] sm:$0x7]
    %v235 = vpack.c.bf16 %v231, %v230
    %v236 = vpack.c.bf16 %v233, %v232
    %v237 = vld [vmem:[%s6] sm:$0x1f]
    %239 = vset.pattern.permute.xlu0 0
    %240 = vperm.xlu0 %239, %v237
    %v241 = vpop.permute.xlu0 %240
    %v244 = vsel %vm174, %v234, 0
    %246 = vmatprep.subr.bf16.mxu0 0
    %247 = vmatpush1.bf16.msra.mxu0 0
    %248 = vmatprep.subr.bf16.mxu0 0
    %249 = vmatpush1.bf16.msra.mxu0 0
    %250 = vmatprep.subr.bf16.mxu0 0
    %251 = vmatpush1.bf16.msra.mxu0 0
    %252 = vmatprep.subr.bf16.mxu0 0
    %253 = vmatpush1.bf16.msra.mxu0 0
    %254 = vmatprep.subr.bf16.mxu0 0
    %255 = vmatpush1.bf16.msra.mxu0 0
    %256 = vmatprep.subr.bf16.mxu0 0
    %257 = vmatpush1.bf16.msra.mxu0 0
    %258 = vmatprep.subr.bf16.mxu0 0
    %259 = vmatpush1.bf16.msra.mxu0 %v236
    %260 = vmatprep.subr.bf16.mxu0 0
    %261 = vmatpush1.bf16.msra.mxu0 %v235
    %262 = vmatprep.subr.bf16.mxu0 0
    %263 = vmatpush2.bf16.msra.mxu0 0
    %264 = vmatprep.subr.bf16.mxu0 0
    %265 = vmatpush2.bf16.msra.mxu0 0
    %266 = vmatprep.subr.bf16.mxu0 0
    %267 = vmatpush2.bf16.msra.mxu0 0
    %268 = vmatprep.subr.bf16.mxu0 0
    %269 = vmatpush2.bf16.msra.mxu0 0
    %270 = vmatprep.subr.bf16.mxu0 0
    %271 = vmatpush2.bf16.msra.mxu0 0
    %272 = vmatprep.subr.bf16.mxu0 0
    %273 = vmatpush2.bf16.msra.mxu0 0
    %274 = vmatprep.subr.bf16.mxu0 0
    %275 = vmatpush2.bf16.msra.mxu0 0
    %276 = vmatprep.subr.bf16.mxu0 0
    %277 = vmatpush2.bf16.msra.mxu0 0
    %278 = vmatprep.mubr.bf16.mxu0 0
    %279 = vmatmul.mubr.bf16.gmra.mxu0 %v244
    %v280 = vpop.f32.mrf.mxu0
    %v281 = vadd.f32 %v241, %v280
    %v282 = vpop.f32.mrf.mxu0
    %v283 = vpop.f32.mrf.mxu0
    %v284 = vpop.f32.mrf.mxu0
    %285 = vdwg.mxu0
    %v287 = vrot.slane %v281, 1
    %v289 = vmax.f32 %v281, %v287
    %v290 = vrot.slane %v281, 2
    %v292 = vmax.f32 %v289, %v290
    %v293 = vrot.slane %v281, 3
    %v295 = vmax.f32 %v292, %v293
    %v296 = vrot.slane %v281, 4
    %v298 = vmax.f32 %v295, %v296
    %v299 = vlaneseq
    %v300 = vshrl.u32 %v299, 7
    %v301 = vsub.s32 0, %v300
    %v302 = vrot.slane %v298, %v301
    %v303 = vsub.f32 %v281, %v302
    %v304 = vmul.f32 %v303, 1.442695
    %v305 = vpow.pop %v304
    %v307 = vrot.slane %v305, 1
    %v309 = vadd.f32 %v305, %v307
    %v310 = vrot.slane %v305, 2
    %v312 = vadd.f32 %v309, %v310
    %v313 = vrot.slane %v305, 3
    %v315 = vadd.f32 %v312, %v313
    %v316 = vrot.slane %v305, 4
    %v318 = vadd.f32 %v315, %v316
    %v319 = vrcp.pop %v318
    %v320 = vlaneseq
    %v321 = vshrl.u32 %v320, 7
    %v322 = vsub.s32 0, %v321
    %v323 = vrot.slane %v319, %v322
    %v324 = vmul.f32 %v305, %v323
    %325 = vst [vmem:[#allocation2] sm:$0x1f] %v324
    // Predicated region
    $region30: #{tpu_custom_call.1} parent=1 // pred_check
      _
    $region31: #{tpu_custom_call.1} parent=1 // pred_check_branch
      %327 = sbr.rel (0) target = $region33
    $region32: #{tpu_custom_call.1} parent=1 // pred_region
      %s329 = ssub.s32 128, 128
      %330 = vsyncadd [#allocation3], %s329
      %s332 = sshll.u32 [#allocation2], 4
      %s333 = int_to_ptr.vmem [resolvable:$true] %s332
      %335 = dma.vmem_to_hbm [thread:$0]  %s333, 128, %s7, [#allocation3]
    $region33: #{tpu_custom_call.1} parent=1 // pred_fallthru
      _
    // Predicated region
    $region34: #{tpu_custom_call.1} parent=1 // pred_check
      _
    $region35: #{tpu_custom_call.1} parent=1 // pred_check_branch
      %337 = sbr.rel (0) target = $region37
    $region36: #{tpu_custom_call.1} parent=1 // pred_region
      %338 = dma.done [#allocation3], 128
    $region37: #{tpu_custom_call.1} parent=1 // pred_fallthru
      _
    %339 = vsyncpa [#allocation3], 1

</llo_original>
